<compile_context>
chip_gen: v6e
topology: v6e:2x2x1
jax: 0.10.0
libtpu: 0.0.40
codegen_flags: <defaults>
</compile_context>

<pallas_src>
import jax
import jax.numpy as jnp
from jax.experimental import pallas as pl
from jax.experimental.pallas import tpu as pltpu


def bahdanau_kernel(q_ref, k_ref,
                    wa_wt_ref, wa_b_ref,
                    ua_wt_ref, ua_b_ref,
                    va_w_ref, va_b_ref,
                    ctx_ref, w_ref):
    TB, S, H = k_ref.shape

    q = q_ref[...]                       # (TB, H)
    k = k_ref[...]                       # (TB, S, H)

    # Wa(query) for the whole batch block: one (TB, H) x (H, H) MXU matmul.
    wa_q = jnp.dot(q, wa_wt_ref[...],
                   preferred_element_type=jnp.float32) + wa_b_ref[...]      # (TB, H)

    # Ua(keys) for the whole block: (TB*S, H) x (H, H) fills MXU rows.
    # (S is the sublane axis; collapsing (TB, S) is layout-friendly.)
    k_flat = k.reshape(TB * S, H)
    ua_k = jnp.dot(k_flat, ua_wt_ref[...],
                   preferred_element_type=jnp.float32) + ua_b_ref[...]      # (TB*S, H)
    ua_k = ua_k.reshape(TB, S, H)

    # tanh(Wa(q) + Ua(k)): each query row broadcast over its S keys.
    t = jnp.tanh(ua_k + wa_q[:, None, :])                                   # (TB, S, H)

    # Va projection as a VPU multiply + lane reduce over H (no transposes,
    # no degenerate 1-output-row MXU matmul).
    va_row = va_w_ref[...].reshape(1, 1, H)
    scores = jnp.sum(t * va_row, axis=-1) + va_b_ref[...]                   # (TB, S)

    # Softmax over the key axis (last / lane axis of the (TB, S) slab).
    m = jnp.max(scores, axis=-1, keepdims=True)
    e = jnp.exp(scores - m)
    denom = jnp.sum(e, axis=-1, keepdims=True)
    weights = e * pl.reciprocal(denom, approx=False)                        # (TB, S)

    # context[b, :] = sum_s weights[b, s] * keys[b, s, :]
    # (VPU multiply + sublane reduce; avoids a batched degenerate matmul.)
    context = jnp.sum(weights[:, :, None] * k, axis=1)                      # (TB, H)

    ctx_ref[...] = context.astype(ctx_ref.dtype)
    w_ref[...] = weights.astype(w_ref.dtype)


def bahdanau_attention(query, keys, wa_w, wa_b, ua_w, ua_b, va_w, va_b, *, tb=8):
    """query: (B, 1, H), keys: (B, S, H). Returns context (B,1,H), weights (B,1,S)."""
    B, one, H = query.shape
    assert one == 1
    _, S, _ = keys.shape

    # Keep the batch block a multiple of 8 so 2-D output blocks satisfy the
    # (8, 128) sublane constraint; pad the batch to a multiple of tb.
    tb = max(8, (tb + 7) // 8 * 8)
    Bp = ((B + tb - 1) // tb) * tb

    q2d = query.reshape(B, H)
    if Bp != B:
        # Zero padding is numerically safe: padded rows just yield a uniform
        # softmax and a zero context, and are sliced off below.
        q2d = jnp.pad(q2d, ((0, Bp - B), (0, 0)))
        keys_p = jnp.pad(keys, ((0, Bp - B), (0, 0), (0, 0)))
    else:
        keys_p = keys

    # Pre-transpose the (H, H) weights once in XLA: y = x @ W.T -> x @ Wt.
    wa_wt = wa_w.T
    ua_wt = ua_w.T
    wa_b2 = wa_b.reshape(1, H)
    ua_b2 = ua_b.reshape(1, H)
    va_w2 = va_w.reshape(1, H)
    va_b2 = va_b.reshape(1, 1)

    grid = (Bp // tb,)
    in_specs = [
        pl.BlockSpec((tb, H),    lambda b: (b, 0)),      # query (lane-dense 2-D)
        pl.BlockSpec((tb, S, H), lambda b: (b, 0, 0)),   # keys
        pl.BlockSpec((H, H),     lambda b: (0, 0)),      # Wa weight (pre-transposed)
        pl.BlockSpec((1, H),     lambda b: (0, 0)),      # Wa bias
        pl.BlockSpec((H, H),     lambda b: (0, 0)),      # Ua weight (pre-transposed)
        pl.BlockSpec((1, H),     lambda b: (0, 0)),      # Ua bias
        pl.BlockSpec((1, H),     lambda b: (0, 0)),      # Va weight (row)
        pl.BlockSpec((1, 1),     lambda b: (0, 0)),      # Va bias
    ]
    out_specs = [
        pl.BlockSpec((tb, H), lambda b: (b, 0)),         # context as (B, H) slab
        pl.BlockSpec((tb, S), lambda b: (b, 0)),         # weights as (B, S) slab
    ]
    out_shape = (
        jax.ShapeDtypeStruct((Bp, H), jnp.float32),
        jax.ShapeDtypeStruct((Bp, S), jnp.float32),
    )

    ctx2d, w2d = pl.pallas_call(
        bahdanau_kernel,
        out_shape=out_shape,
        grid_spec=pltpu.PrefetchScalarGridSpec(
            num_scalar_prefetch=0,
            grid=grid,
            in_specs=in_specs,
            out_specs=out_specs,
        ),
        compiler_params=pltpu.CompilerParams(
            dimension_semantics=("parallel",),
            vmem_limit_bytes=32 * 1024 * 1024,
        ),
    )(q2d, keys_p, wa_wt, wa_b2, ua_wt, ua_b2, va_w2, va_b2)

    context = ctx2d[:B].reshape(B, 1, H)
    weights = w2d[:B].reshape(B, 1, S)
    return context, weights


def reference(query, keys, wa_w, wa_b, ua_w, ua_b, va_w, va_b):
    wa_q = query @ wa_w.T + wa_b            # (B, 1, H)
    ua_k = keys @ ua_w.T + ua_b             # (B, S, H)
    t = jnp.tanh(wa_q + ua_k)               # (B, S, H)
    scores = t @ va_w.T + va_b              # (B, S, 1)
    scores = jnp.swapaxes(scores, 1, 2)     # (B, 1, S)
    weights = jax.nn.softmax(scores, axis=-1)
    context = jnp.einsum("bqs,bsh->bqh", weights, keys)
    return context, weights


if __name__ == "__main__":
    B, S, H = 2, 8, 32
    key = jax.random.PRNGKey(0)
    k0, k1, k2, k3, k4, k5, k6, k7 = jax.random.split(key, 8)

    # Deterministic parameter init (shapes follow nn.Linear(H,H), nn.Linear(H,1)).
    scale = 1.0 / jnp.sqrt(H)
    wa_w = jax.random.uniform(k0, (H, H), jnp.float32, -scale, scale)
    wa_b = jax.random.uniform(k1, (H,), jnp.float32, -scale, scale)
    ua_w = jax.random.uniform(k2, (H, H), jnp.float32, -scale, scale)
    ua_b = jax.random.uniform(k3, (H,), jnp.float32, -scale, scale)
    va_w = jax.random.uniform(k4, (1, H), jnp.float32, -scale, scale)
    va_b = jax.random.uniform(k5, (1,), jnp.float32, -scale, scale)

    query = jax.random.normal(k6, (B, 1, H), jnp.float32)
    keys = jax.random.normal(k7, (B, S, H), jnp.float32)

    ctx, w = bahdanau_attention(query, keys, wa_w, wa_b, ua_w, ua_b, va_w, va_b)
    jax.block_until_ready((ctx, w))

    ctx_ref, w_ref = reference(query, keys, wa_w, wa_b, ua_w, ua_b, va_w, va_b)
    assert jnp.allclose(ctx, ctx_ref, atol=1e-5, rtol=1e-5)
    assert jnp.allclose(w, w_ref, atol=1e-5, rtol=1e-5)

    print("KERNEL_OK")
</pallas_src>

<mosaic_0001>
module attributes {stable_mosaic.version = 11 : i64} {
  func.func @bahdanau_kernel(%arg0: i32, %arg1: memref<8x32xf32, #tpu.memory_space<vmem>>, %arg2: memref<8x8x32xf32, #tpu.memory_space<vmem>>, %arg3: memref<32x32xf32, #tpu.memory_space<vmem>>, %arg4: memref<1x32xf32, #tpu.memory_space<vmem>>, %arg5: memref<32x32xf32, #tpu.memory_space<vmem>>, %arg6: memref<1x32xf32, #tpu.memory_space<vmem>>, %arg7: memref<1x32xf32, #tpu.memory_space<vmem>>, %arg8: memref<1x1xf32, #tpu.memory_space<vmem>>, %arg9: memref<8x32xf32, #tpu.memory_space<vmem>>, %arg10: memref<8x8xf32, #tpu.memory_space<vmem>>) attributes {dimension_semantics = [#tpu.dimension_semantics<parallel>], iteration_bounds = array<i64: 1>, scalar_prefetch = 0 : i64, scratch_operands = 0 : i64, tpu.core_type = #tpu.core_type<tc>, window_params = [{transform_indices = @transform_0, window_bounds = array<i64: 8, 32>}, {transform_indices = @transform_1, window_bounds = array<i64: 8, 8, 32>}, {pipeline_mode = #tpu.pipeline_mode<synchronous>, transform_indices = @transform_2, window_bounds = array<i64: 32, 32>}, {pipeline_mode = #tpu.pipeline_mode<synchronous>, transform_indices = @transform_3, window_bounds = array<i64: 1, 32>}, {pipeline_mode = #tpu.pipeline_mode<synchronous>, transform_indices = @transform_4, window_bounds = array<i64: 32, 32>}, {pipeline_mode = #tpu.pipeline_mode<synchronous>, transform_indices = @transform_5, window_bounds = array<i64: 1, 32>}, {pipeline_mode = #tpu.pipeline_mode<synchronous>, transform_indices = @transform_6, window_bounds = array<i64: 1, 32>}, {pipeline_mode = #tpu.pipeline_mode<synchronous>, transform_indices = @transform_7, window_bounds = array<i64: 1, 1>}, {transform_indices = @transform_8, window_bounds = array<i64: 8, 32>}, {transform_indices = @transform_9, window_bounds = array<i64: 8, 8>}]} {
    %c0 = arith.constant 0 : index
    %c0_0 = arith.constant 0 : index
    %0 = vector.load %arg1[%c0, %c0_0] : memref<8x32xf32, #tpu.memory_space<vmem>>, vector<8x32xf32>
    %c0_1 = arith.constant 0 : index
    %c0_2 = arith.constant 0 : index
    %c0_3 = arith.constant 0 : index
    %1 = vector.load %arg2[%c0_1, %c0_2, %c0_3] : memref<8x8x32xf32, #tpu.memory_space<vmem>>, vector<8x8x32xf32>
    %c0_4 = arith.constant 0 : index
    %c0_5 = arith.constant 0 : index
    %2 = vector.load %arg3[%c0_4, %c0_5] : memref<32x32xf32, #tpu.memory_space<vmem>>, vector<32x32xf32>
    %cst = arith.constant dense<0.000000e+00> : vector<8x32xf32>
    %3 = tpu.matmul %0, %2, %cst {dimension_numbers = #tpu.dot_dimension_numbers<[1], [0], [0], [1], [0, 0, 1, 1], [], []>} : vector<8x32xf32>, vector<32x32xf32>, vector<8x32xf32> -> vector<8x32xf32>
    %c0_6 = arith.constant 0 : index
    %c0_7 = arith.constant 0 : index
    %4 = vector.load %arg4[%c0_6, %c0_7] : memref<1x32xf32, #tpu.memory_space<vmem>>, vector<1x32xf32>
    %5 = vector.broadcast %4 : vector<1x32xf32> to vector<8x32xf32>
    %6 = arith.addf %3, %5 : vector<8x32xf32>
    %7 = vector.shape_cast %1 : vector<8x8x32xf32> to vector<64x32xf32>
    %c0_8 = arith.constant 0 : index
    %c0_9 = arith.constant 0 : index
    %8 = vector.load %arg5[%c0_8, %c0_9] : memref<32x32xf32, #tpu.memory_space<vmem>>, vector<32x32xf32>
    %cst_10 = arith.constant dense<0.000000e+00> : vector<64x32xf32>
    %9 = tpu.matmul %7, %8, %cst_10 {dimension_numbers = #tpu.dot_dimension_numbers<[1], [0], [0], [1], [0, 0, 1, 1], [], []>} : vector<64x32xf32>, vector<32x32xf32>, vector<64x32xf32> -> vector<64x32xf32>
    %c0_11 = arith.constant 0 : index
    %c0_12 = arith.constant 0 : index
    %10 = vector.load %arg6[%c0_11, %c0_12] : memref<1x32xf32, #tpu.memory_space<vmem>>, vector<1x32xf32>
    %11 = vector.broadcast %10 : vector<1x32xf32> to vector<64x32xf32>
    %12 = arith.addf %9, %11 : vector<64x32xf32>
    %13 = vector.shape_cast %12 : vector<64x32xf32> to vector<8x8x32xf32>
    %14 = vector.shape_cast %6 : vector<8x32xf32> to vector<8x1x32xf32>
    %15 = vector.broadcast %14 : vector<8x1x32xf32> to vector<8x8x32xf32>
    %16 = arith.addf %13, %15 : vector<8x8x32xf32>
    %17 = math.tanh %16 : vector<8x8x32xf32>
    %c0_13 = arith.constant 0 : index
    %c0_14 = arith.constant 0 : index
    %18 = vector.load %arg7[%c0_13, %c0_14] : memref<1x32xf32, #tpu.memory_space<vmem>>, vector<1x32xf32>
    %19 = vector.shape_cast %18 : vector<1x32xf32> to vector<1x1x32xf32>
    %20 = vector.broadcast %19 : vector<1x1x32xf32> to vector<8x8x32xf32>
    %21 = arith.mulf %17, %20 : vector<8x8x32xf32>
    %cst_15 = arith.constant dense<0.000000e+00> : vector<8x8xf32>
    %22 = vector.multi_reduction <add>, %21, %cst_15 [2] : vector<8x8x32xf32> to vector<8x8xf32>
    %c0_16 = arith.constant 0 : index
    %c0_17 = arith.constant 0 : index
    %23 = vector.load %arg8[%c0_16, %c0_17] : memref<1x1xf32, #tpu.memory_space<vmem>>, vector<1x1xf32>
    %24 = vector.broadcast %23 : vector<1x1xf32> to vector<8x8xf32>
    %25 = arith.addf %22, %24 : vector<8x8xf32>
    %cst_18 = arith.constant dense<0xFF800000> : vector<8xf32>
    %26 = vector.multi_reduction <maximumf>, %25, %cst_18 [1] : vector<8x8xf32> to vector<8xf32>
    %27 = vector.shape_cast %26 : vector<8xf32> to vector<8x1xf32>
    %28 = vector.broadcast %27 : vector<8x1xf32> to vector<8x8xf32>
    %29 = arith.subf %25, %28 : vector<8x8xf32>
    %30 = math.exp %29 : vector<8x8xf32>
    %cst_19 = arith.constant dense<0.000000e+00> : vector<8xf32>
    %31 = vector.multi_reduction <add>, %30, %cst_19 [1] : vector<8x8xf32> to vector<8xf32>
    %32 = vector.shape_cast %31 : vector<8xf32> to vector<8x1xf32>
    %33 = tpu.reciprocal %32 : vector<8x1xf32> -> vector<8x1xf32>
    %34 = vector.broadcast %33 : vector<8x1xf32> to vector<8x8xf32>
    %35 = arith.mulf %30, %34 : vector<8x8xf32>
    %36 = vector.shape_cast %35 : vector<8x8xf32> to vector<8x8x1xf32>
    %37 = vector.broadcast %36 : vector<8x8x1xf32> to vector<8x8x32xf32>
    %38 = arith.mulf %37, %1 : vector<8x8x32xf32>
    %cst_20 = arith.constant dense<0.000000e+00> : vector<8x32xf32>
    %39 = vector.multi_reduction <add>, %38, %cst_20 [1] : vector<8x8x32xf32> to vector<8x32xf32>
    %c0_21 = arith.constant 0 : index
    %c0_22 = arith.constant 0 : index
    %40 = vector.load %arg9[%c0_21, %c0_22] : memref<8x32xf32, #tpu.memory_space<vmem>>, vector<8x32xf32>
    tpu.vector_store %arg9[%c0_21, %c0_22], %39 {strides = array<i32>} : memref<8x32xf32, #tpu.memory_space<vmem>>, vector<8x32xf32>,
    %c0_23 = arith.constant 0 : index
    %c0_24 = arith.constant 0 : index
    %41 = vector.load %arg10[%c0_23, %c0_24] : memref<8x8xf32, #tpu.memory_space<vmem>>, vector<8x8xf32>
    tpu.vector_store %arg10[%c0_23, %c0_24], %35 {strides = array<i32>} : memref<8x8xf32, #tpu.memory_space<vmem>>, vector<8x8xf32>,
    return
  }
  func.func @transform_0(%arg0: i32) -> (i32, i32) {
    %c0_i32 = arith.constant 0 : i32
    %c0_i32_0 = arith.constant 0 : i32
    return %arg0, %c0_i32 : i32, i32
  }
  func.func @transform_1(%arg0: i32) -> (i32, i32, i32) {
    %c0_i32 = arith.constant 0 : i32
    %c0_i32_0 = arith.constant 0 : i32
    %c0_i32_1 = arith.constant 0 : i32
    return %arg0, %c0_i32, %c0_i32_0 : i32, i32, i32
  }
  func.func @transform_2(%arg0: i32) -> (i32, i32) {
    %c0_i32 = arith.constant 0 : i32
    %c0_i32_0 = arith.constant 0 : i32
    %c0_i32_1 = arith.constant 0 : i32
    return %c0_i32, %c0_i32_0 : i32, i32
  }
  func.func @transform_3(%arg0: i32) -> (i32, i32) {
    %c0_i32 = arith.constant 0 : i32
    %c0_i32_0 = arith.constant 0 : i32
    %c0_i32_1 = arith.constant 0 : i32
    return %c0_i32, %c0_i32_0 : i32, i32
  }
  func.func @transform_4(%arg0: i32) -> (i32, i32) {
    %c0_i32 = arith.constant 0 : i32
    %c0_i32_0 = arith.constant 0 : i32
    %c0_i32_1 = arith.constant 0 : i32
    return %c0_i32, %c0_i32_0 : i32, i32
  }
  func.func @transform_5(%arg0: i32) -> (i32, i32) {
    %c0_i32 = arith.constant 0 : i32
    %c0_i32_0 = arith.constant 0 : i32
    %c0_i32_1 = arith.constant 0 : i32
    return %c0_i32, %c0_i32_0 : i32, i32
  }
  func.func @transform_6(%arg0: i32) -> (i32, i32) {
    %c0_i32 = arith.constant 0 : i32
    %c0_i32_0 = arith.constant 0 : i32
    %c0_i32_1 = arith.constant 0 : i32
    return %c0_i32, %c0_i32_0 : i32, i32
  }
  func.func @transform_7(%arg0: i32) -> (i32, i32) {
    %c0_i32 = arith.constant 0 : i32
    %c0_i32_0 = arith.constant 0 : i32
    %c0_i32_1 = arith.constant 0 : i32
    return %c0_i32, %c0_i32_0 : i32, i32
  }
  func.func @transform_8(%arg0: i32) -> (i32, i32) {
    %c0_i32 = arith.constant 0 : i32
    %c0_i32_0 = arith.constant 0 : i32
    return %arg0, %c0_i32 : i32, i32
  }
  func.func @transform_9(%arg0: i32) -> (i32, i32) {
    %c0_i32 = arith.constant 0 : i32
    %c0_i32_0 = arith.constant 0 : i32
    return %arg0, %c0_i32 : i32, i32
  }
}

</mosaic_0001>

<llo_original>
// kernel: tpu_custom_call.1
$region0: #{tpu_custom_call.1}
  #allocation0 [shape = 'u32[]', space=smem, size = 0x4, offset = 0x4, fixed_abs, tag = 'smem constant byte address 0x4 - core index']
  #allocation1 [shape = 'u32[144,128]{1,0:T(1,128)}', space=vmem, size = 0x12000, scoped, tag = 'internal scratch']
  #allocation2 [shape = 'f32[1,1]{1,0:T(1,128)S(1)}', space=vmem, size = 0x200, scoped, tag = 'scoped memory for tpu_custom_call.1']
  %s0 = inlined_call_operand.hbm [shape: f32[8,32], index: 0, kind: input, shape index: {}]
  %s1 = inlined_call_operand.hbm [shape: f32[8,8,32], index: 1, kind: input, shape index: {}]
  %s2 = inlined_call_operand.hbm [shape: f32[32,32], index: 2, kind: input, shape index: {}]
  %s3 = inlined_call_operand.vmem [shape: f32[1,32], index: 3, kind: input, shape index: {}]
  %s4 = inlined_call_operand.hbm [shape: f32[32,32], index: 4, kind: input, shape index: {}]
  %s5 = inlined_call_operand.vmem [shape: f32[1,32], index: 5, kind: input, shape index: {}]
  %s6 = inlined_call_operand.vmem [shape: f32[1,32], index: 6, kind: input, shape index: {}]
  %s7 = inlined_call_operand.<no memory space> [shape: f32[1,1], index: 7, kind: input, shape index: {}]
  %s8 = inlined_call_operand.hbm [shape: f32[8,32], index: 8, kind: output, shape index: {0}]
  %s9 = inlined_call_operand.hbm [shape: f32[8,8], index: 9, kind: output, shape index: {1}]
  %10 = xla_tuple %s8, %s9
  %s11 = sld [smem:[#allocation0]]
  $region66: #{tpu_custom_call.1} parent=0
    _
  %s13 = ssub.s32 1, %s11
  %s14 = scalar_select 0, %s13, %s11
  %v15 = vstv %s7
  %16 = vst [vmem:[#allocation2] sm:$0x1] %v15
  $region1: #{tpu_custom_call.1} parent=0
    #allocation3 [shape = 'u8[4096]{0}', space=vmem, size = 0x1000, scoped, tag = 'input window, operand 0, single buffered']
    #allocation4 [shape = 's32[1]{0}', space=sflag, size = 0x4, scoped, tag = 'scoped memory for tpu_custom_call.1']
    #allocation5 [shape = 's32[1]{0}', space=sflag, size = 0x4, scoped, tag = 'scoped memory for tpu_custom_call.1']
    #allocation6 [shape = 'u8[32768]{0}', space=vmem, size = 0x8000, scoped, tag = 'input window, operand 1, single buffered']
    #allocation7 [shape = 's32[1]{0}', space=sflag, size = 0x4, scoped, tag = 'scoped memory for tpu_custom_call.1']
    #allocation8 [shape = 'u8[16384]{0}', space=vmem, size = 0x4000, scoped, tag = 'input window, operand 2, single buffered']
    #allocation9 [shape = 'u8[16384]{0}', space=vmem, size = 0x4000, scoped, tag = 'input window, operand 4, single buffered']
    #allocation10 [shape = 's32[1]{0}', space=sflag, size = 0x4, scoped, tag = 'scoped memory for tpu_custom_call.1']
    #allocation11 [shape = 'u8[4096]{0}', space=vmem, size = 0x1000, scoped, tag = 'output window, operand 0, single buffered']
    #allocation12 [shape = 'u8[4096]{0}', space=vmem, size = 0x1000, scoped, tag = 'output window, operand 1, single buffered']
    #allocation13 [shape = 's32[1]{0}', space=sflag, size = 0x4, scoped, tag = 'scoped memory for tpu_custom_call.1']
    %17 = vsyncpa [#allocation4], 0
    %18 = vsyncpa [#allocation7], 0
    %19 = vsyncpa [#allocation10], 0
    %20 = vsyncpa [#allocation5], 0
    %21 = vsyncpa [#allocation13], 0
    // Predicated region
    $region2: #{tpu_custom_call.1} parent=1 // pred_check
      _
    $region3: #{tpu_custom_call.1} parent=1 // pred_check_branch
      %23 = sbr.rel (0) target = $region5
    $region4: #{tpu_custom_call.1} parent=1 // pred_region
      %s25 = ssub.s32 128, 128
      %26 = vsyncadd [#allocation4], %s25
      %s28 = sshll.u32 [#allocation3], 4
      %s29 = int_to_ptr.vmem [resolvable:$true] %s28
      %31 = dma.hbm_to_vmem [thread:$0]  %s0, 128, %s29, [#allocation4]
    $region5: #{tpu_custom_call.1} parent=1 // pred_fallthru
      _
    // Predicated region
    $region6: #{tpu_custom_call.1} parent=1 // pred_check
      _
    $region7: #{tpu_custom_call.1} parent=1 // pred_check_branch
      %33 = sbr.rel (0) target = $region9
    $region8: #{tpu_custom_call.1} parent=1 // pred_region
      %s35 = ssub.s32 1024, 1024
      %36 = vsyncadd [#allocation7], %s35
      %s37 = sshll.u32 [#allocation6], 4
      %s38 = int_to_ptr.vmem [resolvable:$true] %s37
      %43 = dma.hbm_to_vmem [thread:$0]  %s1, 1024, %s38, [#allocation7], 128, 128, 8
    $region9: #{tpu_custom_call.1} parent=1 // pred_fallthru
      _
    // Predicated region
    $region10: #{tpu_custom_call.1} parent=1 // pred_check
      _
    $region11: #{tpu_custom_call.1} parent=1 // pred_check_branch
      %45 = sbr.rel (0) target = $region13
    $region12: #{tpu_custom_call.1} parent=1 // pred_region
      %s47 = ssub.s32 512, 512
      %48 = vsyncadd [#allocation7], %s47
      %s49 = sshll.u32 [#allocation8], 4
      %s50 = int_to_ptr.vmem [resolvable:$true] %s49
      %55 = dma.hbm_to_vmem [thread:$0]  %s2, 512, %s50, [#allocation7], 128, 128, 8
    $region13: #{tpu_custom_call.1} parent=1 // pred_fallthru
      _
    // Predicated region
    $region14: #{tpu_custom_call.1} parent=1 // pred_check
      _
    $region15: #{tpu_custom_call.1} parent=1 // pred_check_branch
      %57 = sbr.rel (0) target = $region17
    $region16: #{tpu_custom_call.1} parent=1 // pred_region
      _
    $region17: #{tpu_custom_call.1} parent=1 // pred_fallthru
      _
    // Predicated region
    $region18: #{tpu_custom_call.1} parent=1 // pred_check
      _
    $region19: #{tpu_custom_call.1} parent=1 // pred_check_branch
      %59 = sbr.rel (0) target = $region21
    $region20: #{tpu_custom_call.1} parent=1 // pred_region
      %s61 = ssub.s32 512, 512
      %62 = vsyncadd [#allocation10], %s61
      %s63 = sshll.u32 [#allocation9], 4
      %s64 = int_to_ptr.vmem [resolvable:$true] %s63
      %69 = dma.hbm_to_vmem [thread:$0]  %s4, 512, %s64, [#allocation10], 128, 128, 8
    $region21: #{tpu_custom_call.1} parent=1 // pred_fallthru
      _
    // Predicated region
    $region22: #{tpu_custom_call.1} parent=1 // pred_check
      _
    $region23: #{tpu_custom_call.1} parent=1 // pred_check_branch
      %71 = sbr.rel (0) target = $region25
    $region24: #{tpu_custom_call.1} parent=1 // pred_region
      _
    $region25: #{tpu_custom_call.1} parent=1 // pred_fallthru
      _
    // Predicated region
    $region26: #{tpu_custom_call.1} parent=1 // pred_check
      _
    $region27: #{tpu_custom_call.1} parent=1 // pred_check_branch
      %73 = sbr.rel (0) target = $region29
    $region28: #{tpu_custom_call.1} parent=1 // pred_region
      _
    $region29: #{tpu_custom_call.1} parent=1 // pred_fallthru
      _
    // Predicated region
    $region30: #{tpu_custom_call.1} parent=1 // pred_check
      _
    $region31: #{tpu_custom_call.1} parent=1 // pred_check_branch
      %75 = sbr.rel (0) target = $region33
    $region32: #{tpu_custom_call.1} parent=1 // pred_region
      _
    $region33: #{tpu_custom_call.1} parent=1 // pred_fallthru
      _
    // Predicated region
    $region34: #{tpu_custom_call.1} parent=1 // pred_check
      _
    $region35: #{tpu_custom_call.1} parent=1 // pred_check_branch
      %77 = sbr.rel (0) target = $region37
    $region36: #{tpu_custom_call.1} parent=1 // pred_region
      %78 = dma.done [#allocation4], 128
    $region37: #{tpu_custom_call.1} parent=1 // pred_fallthru
      _
    // Predicated region
    $region38: #{tpu_custom_call.1} parent=1 // pred_check
      _
    $region39: #{tpu_custom_call.1} parent=1 // pred_check_branch
      %80 = sbr.rel (0) target = $region41
    $region40: #{tpu_custom_call.1} parent=1 // pred_region
      %81 = dma.done [#allocation7], 1024
    $region41: #{tpu_custom_call.1} parent=1 // pred_fallthru
      _
    // Predicated region
    $region42: #{tpu_custom_call.1} parent=1 // pred_check
      _
    $region43: #{tpu_custom_call.1} parent=1 // pred_check_branch
      %83 = sbr.rel (0) target = $region45
    $region44: #{tpu_custom_call.1} parent=1 // pred_region
      %84 = dma.done [#allocation7], 512
    $region45: #{tpu_custom_call.1} parent=1 // pred_fallthru
      _
    // Predicated region
    $region46: #{tpu_custom_call.1} parent=1 // pred_check
      _
    $region47: #{tpu_custom_call.1} parent=1 // pred_check_branch
      %86 = sbr.rel (0) target = $region49
    $region48: #{tpu_custom_call.1} parent=1 // pred_region
      %87 = dma.done [#allocation10], 512
    $region49: #{tpu_custom_call.1} parent=1 // pred_fallthru
      _
    %v88 = vld [vmem:[#allocation3] sm:$0xff]
    %v89 = vld [vmem:[#allocation6] sm:$0xff]
    %v90 = vld [vmem:[#allocation6 + $0x8] sm:$0xff]
    %v91 = vld [vmem:[#allocation6 + $0x10] sm:$0xff]
    %v92 = vld [vmem:[#allocation6 + $0x18] sm:$0xff]
    %v93 = vld [vmem:[#allocation6 + $0x20] sm:$0xff]
    %v94 = vld [vmem:[#allocation6 + $0x28] sm:$0xff]
    %v95 = vld [vmem:[#allocation6 + $0x30] sm:$0xff]
    %v96 = vld [vmem:[#allocation6 + $0x38] sm:$0xff]
    %v97 = vld [vmem:[#allocation8] sm:$0xff]
    %v98 = vld [vmem:[#allocation8 + $0x8] sm:$0xff]
    %v99 = vld [vmem:[#allocation8 + $0x10] sm:$0xff]
    %v100 = vld [vmem:[#allocation8 + $0x18] sm:$0xff]
    %v101 = vld [vmem:[%s3] sm:$0x1]
    %v103 = vlaneseq
    %v104 = vshrl.u32 %v103, 7
    %v105 = vsub.s32 0, %v104
    %v106 = vrot.slane %v101, %v105
    %vm108 = vcmask 261120
    %v110 = vsel %vm108, %v88, 0
    %112 = vmatprep.subr.mxu0 0.0
    %113 = vmatpush1.msra.mxu0 0.0
    %114 = vmatprep.subr.mxu0 0.0
    %115 = vmatpush1.msra.mxu0 0.0
    %116 = vmatprep.subr.mxu0 0.0
    %117 = vmatpush1.msra.mxu0 0.0
    %118 = vmatprep.subr.mxu0 0.0
    %119 = vmatpush1.msra.mxu0 0.0
    %120 = vmatprep.subr.mxu0 0.0
    %121 = vmatpush1.msra.mxu0 0.0
    %122 = vmatprep.subr.mxu0 0.0
    %123 = vmatpush1.msra.mxu0 0.0
    %124 = vmatprep.subr.mxu0 0.0
    %125 = vmatpush1.msra.mxu0 0.0
    %126 = vmatprep.subr.mxu0 0.0
    %127 = vmatpush1.msra.mxu0 0.0
    %128 = vmatprep.subr.mxu0 0.0
    %129 = vmatpush1.msra.mxu0 0.0
    %130 = vmatprep.subr.mxu0 0.0
    %131 = vmatpush1.msra.mxu0 0.0
    %132 = vmatprep.subr.mxu0 0.0
    %133 = vmatpush1.msra.mxu0 0.0
    %134 = vmatprep.subr.mxu0 0.0
    %135 = vmatpush1.msra.mxu0 0.0
    %136 = vmatprep.subr.mxu0 0.0
    %137 = vmatpush1.msra.mxu0 %v100
    %138 = vmatprep.subr.mxu0 0.0
    %139 = vmatpush1.msra.mxu0 %v99
    %140 = vmatprep.subr.mxu0 0.0
    %141 = vmatpush1.msra.mxu0 %v98
    %142 = vmatprep.subr.mxu0 0.0
    %143 = vmatpush1.msra.mxu0 %v97
    %144 = vmatprep.subr.mxu0 0.0
    %145 = vmatpush2.msra.mxu0 0.0
    %146 = vmatprep.subr.mxu0 0.0
    %147 = vmatpush2.msra.mxu0 0.0
    %148 = vmatprep.subr.mxu0 0.0
    %149 = vmatpush2.msra.mxu0 0.0
    %150 = vmatprep.subr.mxu0 0.0
    %151 = vmatpush2.msra.mxu0 0.0
    %152 = vmatprep.subr.mxu0 0.0
    %153 = vmatpush2.msra.mxu0 0.0
    %154 = vmatprep.subr.mxu0 0.0
    %155 = vmatpush2.msra.mxu0 0.0
    %156 = vmatprep.subr.mxu0 0.0
    %157 = vmatpush2.msra.mxu0 0.0
    %158 = vmatprep.subr.mxu0 0.0
    %159 = vmatpush2.msra.mxu0 0.0
    %160 = vmatprep.subr.mxu0 0.0
    %161 = vmatpush2.msra.mxu0 0.0
    %162 = vmatprep.subr.mxu0 0.0
    %163 = vmatpush2.msra.mxu0 0.0
    %164 = vmatprep.subr.mxu0 0.0
    %165 = vmatpush2.msra.mxu0 0.0
    %166 = vmatprep.subr.mxu0 0.0
    %167 = vmatpush2.msra.mxu0 0.0
    %168 = vmatprep.subr.mxu0 0.0
    %169 = vmatpush2.msra.mxu0 0.0
    %170 = vmatprep.subr.mxu0 0.0
    %171 = vmatpush2.msra.mxu0 0.0
    %172 = vmatprep.subr.mxu0 0.0
    %173 = vmatpush2.msra.mxu0 0.0
    %174 = vmatprep.subr.mxu0 0.0
    %175 = vmatpush2.msra.mxu0 0.0
    %176 = vmatprep.mubr.f32.mxu0 0.0
    %177 = vmatmul.mubr.f32.gmra.mxu0 %v110
    %v178 = vpop.f32.mrf.mxu0
    %v179 = vadd.f32 %v106, %v178
    %v180 = vpop.f32.mrf.mxu0
    %181 = vdwg.mxu0
    %v182 = vld [vmem:[#allocation9] sm:$0xff]
    %v183 = vld [vmem:[#allocation9 + $0x8] sm:$0xff]
    %v184 = vld [vmem:[#allocation9 + $0x10] sm:$0xff]
    %v185 = vld [vmem:[#allocation9 + $0x18] sm:$0xff]
    %v186 = vld [vmem:[%s5] sm:$0x1]
    %v188 = vlaneseq
    %v189 = vshrl.u32 %v188, 7
    %v190 = vsub.s32 0, %v189
    %v191 = vrot.slane %v186, %v190
    %v194 = vsel %vm108, %v89, 0
    %v197 = vsel %vm108, %v90, 0
    %v200 = vsel %vm108, %v91, 0
    %v203 = vsel %vm108, %v92, 0
    %v206 = vsel %vm108, %v93, 0
    %v209 = vsel %vm108, %v94, 0
    %v212 = vsel %vm108, %v95, 0
    %v215 = vsel %vm108, %v96, 0
    %217 = vmatprep.subr.mxu0 0.0
    %218 = vmatpush1.msra.mxu0 0.0
    %219 = vmatprep.subr.mxu0 0.0
    %220 = vmatpush1.msra.mxu0 0.0
    %221 = vmatprep.subr.mxu0 0.0
    %222 = vmatpush1.msra.mxu0 0.0
    %223 = vmatprep.subr.mxu0 0.0
    %224 = vmatpush1.msra.mxu0 0.0
    %225 = vmatprep.subr.mxu0 0.0
    %226 = vmatpush1.msra.mxu0 0.0
    %227 = vmatprep.subr.mxu0 0.0
    %228 = vmatpush1.msra.mxu0 0.0
    %229 = vmatprep.subr.mxu0 0.0
    %230 = vmatpush1.msra.mxu0 0.0
    %231 = vmatprep.subr.mxu0 0.0
    %232 = vmatpush1.msra.mxu0 0.0
    %233 = vmatprep.subr.mxu0 0.0
    %234 = vmatpush1.msra.mxu0 0.0
    %235 = vmatprep.subr.mxu0 0.0
    %236 = vmatpush1.msra.mxu0 0.0
    %237 = vmatprep.subr.mxu0 0.0
    %238 = vmatpush1.msra.mxu0 0.0
    %239 = vmatprep.subr.mxu0 0.0
    %240 = vmatpush1.msra.mxu0 0.0
    %241 = vmatprep.subr.mxu0 0.0
    %242 = vmatpush1.msra.mxu0 %v185
    %243 = vmatprep.subr.mxu0 0.0
    %244 = vmatpush1.msra.mxu0 %v184
    %245 = vmatprep.subr.mxu0 0.0
    %246 = vmatpush1.msra.mxu0 %v183
    %247 = vmatprep.subr.mxu0 0.0
    %248 = vmatpush1.msra.mxu0 %v182
    %249 = vmatprep.subr.mxu0 0.0
    %250 = vmatpush2.msra.mxu0 0.0
    %251 = vmatprep.subr.mxu0 0.0
    %252 = vmatpush2.msra.mxu0 0.0
    %253 = vmatprep.subr.mxu0 0.0
    %254 = vmatpush2.msra.mxu0 0.0
    %255 = vmatprep.subr.mxu0 0.0
    %256 = vmatpush2.msra.mxu0 0.0
    %257 = vmatprep.subr.mxu0 0.0
    %258 = vmatpush2.msra.mxu0 0.0
    %259 = vmatprep.subr.mxu0 0.0
    %260 = vmatpush2.msra.mxu0 0.0
    %261 = vmatprep.subr.mxu0 0.0
    %262 = vmatpush2.msra.mxu0 0.0
    %263 = vmatprep.subr.mxu0 0.0
    %264 = vmatpush2.msra.mxu0 0.0
    %265 = vmatprep.subr.mxu0 0.0
    %266 = vmatpush2.msra.mxu0 0.0
    %267 = vmatprep.subr.mxu0 0.0
    %268 = vmatpush2.msra.mxu0 0.0
    %269 = vmatprep.subr.mxu0 0.0
    %270 = vmatpush2.msra.mxu0 0.0
    %271 = vmatprep.subr.mxu0 0.0
    %272 = vmatpush2.msra.mxu0 0.0
    %273 = vmatprep.subr.mxu0 0.0
    %274 = vmatpush2.msra.mxu0 0.0
    %275 = vmatprep.subr.mxu0 0.0
    %276 = vmatpush2.msra.mxu0 0.0
    %277 = vmatprep.subr.mxu0 0.0
    %278 = vmatpush2.msra.mxu0 0.0
    %279 = vmatprep.subr.mxu0 0.0
    %280 = vmatpush2.msra.mxu0 0.0
    %281 = vmatprep.mubr.f32.mxu0 0.0
    %282 = vmatmul.mubr.f32.gmra.mxu0 %v194
    %v283 = vpop.f32.mrf.mxu0
    %v284 = vadd.f32 %v191, %v283
    %v285 = vpop.f32.mrf.mxu0
    %286 = vmatprep.mubr.f32.mxu0 0.0
    %287 = vmatmul.mubr.f32.gmra.mxu0 %v197
    %v288 = vpop.f32.mrf.mxu0
    %v289 = vadd.f32 %v191, %v288
    %v290 = vpop.f32.mrf.mxu0
    %291 = vmatprep.mubr.f32.mxu0 0.0
    %292 = vmatmul.mubr.f32.gmra.mxu0 %v200
    %v293 = vpop.f32.mrf.mxu0
    %v294 = vadd.f32 %v191, %v293
    %v295 = vpop.f32.mrf.mxu0
    %296 = vmatprep.mubr.f32.mxu0 0.0
    %297 = vmatmul.mubr.f32.gmra.mxu0 %v203
    %v298 = vpop.f32.mrf.mxu0
    %v299 = vadd.f32 %v191, %v298
    %v300 = vpop.f32.mrf.mxu0
    %301 = vmatprep.mubr.f32.mxu0 0.0
    %302 = vmatmul.mubr.f32.gmra.mxu0 %v206
    %v303 = vpop.f32.mrf.mxu0
    %v304 = vadd.f32 %v191, %v303
    %v305 = vpop.f32.mrf.mxu0
    %306 = vmatprep.mubr.f32.mxu0 0.0
    %307 = vmatmul.mubr.f32.gmra.mxu0 %v209
    %v308 = vpop.f32.mrf.mxu0
    %v309 = vadd.f32 %v191, %v308
    %v310 = vpop.f32.mrf.mxu0
    %311 = vmatprep.mubr.f32.mxu0 0.0
    %312 = vmatmul.mubr.f32.gmra.mxu0 %v212
    %v313 = vpop.f32.mrf.mxu0
    %v314 = vadd.f32 %v191, %v313
    %v315 = vpop.f32.mrf.mxu0
    %316 = vmatprep.mubr.f32.mxu0 0.0
    %317 = vmatmul.mubr.f32.gmra.mxu0 %v215
    %v318 = vpop.f32.mrf.mxu0
    %v319 = vadd.f32 %v191, %v318
    %v320 = vpop.f32.mrf.mxu0
    %321 = vdwg.mxu0
    %v323 = vcombine.high %v179, %v179
    %v325 = vunpack.c.l.s4 1966171168
    %v326 = vunpack.c.0.s8 %v325
    %v327 = vlaneseq
    %v328 = vshrl.u32 %v327, 7
    %v329 = vsub.s32 %v326, %v328
    %v330 = vrot.slane %v179, %v329
    %v332 = vunpack.c.l.s4 1966171168
    %v333 = vunpack.c.0.s8 %v332
    %v334 = vlaneseq
    %v335 = vshrl.u32 %v334, 7
    %v336 = vsub.s32 %v333, %v335
    %v337 = vrot.slane %v323, %v336
    %v338 = vcombine.high %v330, %v330
    %v339 = vcombine.high %v337, %v337
    %v341 = vunpack.c.l.s4 1966171168
    %v342 = vunpack.c.0.s8 %v341
    %v343 = vlaneseq
    %v344 = vshrl.u32 %v343, 7
    %v345 = vsub.s32 %v342, %v344
    %v346 = vrot.slane %v330, %v345
    %v348 = vunpack.c.l.s4 1966171168
    %v349 = vunpack.c.0.s8 %v348
    %v350 = vlaneseq
    %v351 = vshrl.u32 %v350, 7
    %v352 = vsub.s32 %v349, %v351
    %v353 = vrot.slane %v337, %v352
    %v355 = vunpack.c.l.s4 1966171168
    %v356 = vunpack.c.0.s8 %v355
    %v357 = vlaneseq
    %v358 = vshrl.u32 %v357, 7
    %v359 = vsub.s32 %v356, %v358
    %v360 = vrot.slane %v338, %v359
    %v362 = vunpack.c.l.s4 1966171168
    %v363 = vunpack.c.0.s8 %v362
    %v364 = vlaneseq
    %v365 = vshrl.u32 %v364, 7
    %v366 = vsub.s32 %v363, %v365
    %v367 = vrot.slane %v339, %v366
    %v368 = vcombine.high %v346, %v346
    %v369 = vcombine.high %v353, %v353
    %v370 = vcombine.high %v360, %v360
    %v371 = vcombine.high %v367, %v367
    %v372 = vlaneseq
    %v373 = vshrl.u32 %v372, 7
    %v374 = vsub.s32 0, %v373
    %v375 = vrot.slane %v346, %v374
    %v376 = vlaneseq
    %v377 = vshrl.u32 %v376, 7
    %v378 = vsub.s32 0, %v377
    %v379 = vrot.slane %v360, %v378
    %v380 = vlaneseq
    %v381 = vshrl.u32 %v380, 7
    %v382 = vsub.s32 0, %v381
    %v383 = vrot.slane %v368, %v382
    %v384 = vlaneseq
    %v385 = vshrl.u32 %v384, 7
    %v386 = vsub.s32 0, %v385
    %v387 = vrot.slane %v370, %v386
    %v388 = vlaneseq
    %v389 = vshrl.u32 %v388, 7
    %v390 = vsub.s32 0, %v389
    %v391 = vrot.slane %v353, %v390
    %v392 = vlaneseq
    %v393 = vshrl.u32 %v392, 7
    %v394 = vsub.s32 0, %v393
    %v395 = vrot.slane %v367, %v394
    %v396 = vlaneseq
    %v397 = vshrl.u32 %v396, 7
    %v398 = vsub.s32 0, %v397
    %v399 = vrot.slane %v369, %v398
    %v400 = vlaneseq
    %v401 = vshrl.u32 %v400, 7
    %v402 = vsub.s32 0, %v401
    %v403 = vrot.slane %v371, %v402
    %v412 = vadd.f32 %v284, %v375
    %v413 = vadd.f32 %v289, %v379
    %v414 = vadd.f32 %v294, %v383
    %v415 = vadd.f32 %v299, %v387
    %v416 = vadd.f32 %v304, %v391
    %v417 = vadd.f32 %v309, %v395
    %v418 = vadd.f32 %v314, %v399
    %v419 = vadd.f32 %v319, %v403
    %v420 = vtanh.pop %v412
    %v421 = vtanh.pop %v413
    %v422 = vtanh.pop %v414
    %v423 = vtanh.pop %v415
    %v424 = vtanh.pop %v416
    %v425 = vtanh.pop %v417
    %v426 = vtanh.pop %v418
    %v427 = vtanh.pop %v419
    %v428 = vld [vmem:[%s6] sm:$0x1]
    %v430 = vlaneseq
    %v431 = vshrl.u32 %v430, 7
    %v432 = vsub.s32 0, %v431
    %v433 = vrot.slane %v428, %v432
    %v435 = vmul.f32 %v420, %v433
    %v436 = vmul.f32 %v421, %v433
    %v437 = vmul.f32 %v422, %v433
    %v438 = vmul.f32 %v423, %v433
    %v439 = vmul.f32 %v424, %v433
    %v440 = vmul.f32 %v425, %v433
    %v441 = vmul.f32 %v426, %v433
    %v442 = vmul.f32 %v427, %v433
    %v443 = vsel %vm108, %v435, 0.0
    %444 = vadd.xlane.f32.xlu0 %v443
    %v445 = vpop.xlane.xlu0 %444
    %v446 = vsel %vm108, %v436, 0.0
    %447 = vadd.xlane.f32.xlu0 %v446
    %v448 = vpop.xlane.xlu0 %447
    %v449 = vsel %vm108, %v437, 0.0
    %450 = vadd.xlane.f32.xlu0 %v449
    %v451 = vpop.xlane.xlu0 %450
    %v452 = vsel %vm108, %v438, 0.0
    %453 = vadd.xlane.f32.xlu0 %v452
    %v454 = vpop.xlane.xlu0 %453
    %v455 = vsel %vm108, %v439, 0.0
    %456 = vadd.xlane.f32.xlu0 %v455
    %v457 = vpop.xlane.xlu0 %456
    %v458 = vsel %vm108, %v440, 0.0
    %459 = vadd.xlane.f32.xlu0 %v458
    %v460 = vpop.xlane.xlu0 %459
    %v461 = vsel %vm108, %v441, 0.0
    %462 = vadd.xlane.f32.xlu0 %v461
    %v463 = vpop.xlane.xlu0 %462
    %v464 = vsel %vm108, %v442, 0.0
    %465 = vadd.xlane.f32.xlu0 %v464
    %v466 = vpop.xlane.xlu0 %465
    %v467 = vld [vmem:[#allocation2] sm:$0x1]
    %v469 = vlaneseq
    %v470 = vshrl.u32 %v469, 7
    %v471 = vsub.s32 0, %v470
    %v472 = vrot.slane %v467, %v471
    %473 = vset.pattern.permute.xlu0 0
    %474 = vperm.xlu0 %473, %v472
    %v475 = vpop.permute.xlu0 %474
    %v477 = vadd.f32 %v445, %v475
    %v478 = vadd.f32 %v448, %v475
    %v479 = vadd.f32 %v451, %v475
    %v480 = vadd.f32 %v454, %v475
    %v481 = vadd.f32 %v457, %v475
    %v482 = vadd.f32 %v460, %v475
    %v483 = vadd.f32 %v463, %v475
    %v484 = vadd.f32 %v466, %v475
    %v493 = vlaneseq
    %v494 = vand.u32 %v493, 127
    %v495 = vlaneseq
    %v496 = vshrl.u32 %v495, 7
    %v497 = vsub.s32 %v494, %v496
    %v498 = vrot.slane %v477, %v497
    %v499 = vlaneseq
    %v500 = vshrl.u32 %v499, 7
    %v501 = vsub.s32 %v494, %v500
    %v502 = vrot.slane %v478, %v501
    %v503 = vlaneseq
    %v504 = vshrl.u32 %v503, 7
    %v505 = vsub.s32 %v494, %v504
    %v506 = vrot.slane %v479, %v505
    %v507 = vlaneseq
    %v508 = vshrl.u32 %v507, 7
    %v509 = vsub.s32 %v494, %v508
    %v510 = vrot.slane %v480, %v509
    %v511 = vlaneseq
    %v512 = vshrl.u32 %v511, 7
    %v513 = vsub.s32 %v494, %v512
    %v514 = vrot.slane %v481, %v513
    %v515 = vlaneseq
    %v516 = vshrl.u32 %v515, 7
    %v517 = vsub.s32 %v494, %v516
    %v518 = vrot.slane %v482, %v517
    %v519 = vlaneseq
    %v520 = vshrl.u32 %v519, 7
    %v521 = vsub.s32 %v494, %v520
    %v522 = vrot.slane %v483, %v521
    %v523 = vlaneseq
    %v524 = vshrl.u32 %v523, 7
    %v525 = vsub.s32 %v494, %v524
    %v526 = vrot.slane %v484, %v525
    %vm527 = vcmask 1041409
    %v528 = vsel %vm527, %v502, %v498
    %vm529 = vcmask 1042434
    %v530 = vsel %vm529, %v506, %v528
    %vm531 = vcmask 1043459
    %v532 = vsel %vm531, %v510, %v530
    %vm533 = vcmask 1044484
    %v534 = vsel %vm533, %v514, %v532
    %vm535 = vcmask 1045509
    %v536 = vsel %vm535, %v518, %v534
    %vm537 = vcmask 1046534
    %v538 = vsel %vm537, %v522, %v536
    %vm539 = vcmask 1047559
    %v540 = vsel %vm539, %v526, %v538
    %vm542 = vcmask 64512
    %v543 = vsel %vm542, %v540, -inf
    %544 = vmax.xlane.f32.xlu0 %v543
    %v545 = vpop.xlane.xlu0 %544
    %v547 = vlaneseq
    %v548 = vshrl.u32 %v547, 7
    %v549 = vsub.s32 0, %v548
    %v550 = vrot.slane %v545, %v549
    %v551 = vlaneseq
    %v552 = vshrl.u32 %v551, 7
    %v553 = vsub.s32 1, %v552
    %v554 = vrot.slane %v545, %v553
    %v555 = vlaneseq
    %v556 = vshrl.u32 %v555, 7
    %v557 = vsub.s32 2, %v556
    %v558 = vrot.slane %v545, %v557
    %v559 = vlaneseq
    %v560 = vshrl.u32 %v559, 7
    %v561 = vsub.s32 3, %v560
    %v562 = vrot.slane %v545, %v561
    %v563 = vlaneseq
    %v564 = vshrl.u32 %v563, 7
    %v565 = vsub.s32 4, %v564
    %v566 = vrot.slane %v545, %v565
    %v567 = vlaneseq
    %v568 = vshrl.u32 %v567, 7
    %v569 = vsub.s32 5, %v568
    %v570 = vrot.slane %v545, %v569
    %v571 = vlaneseq
    %v572 = vshrl.u32 %v571, 7
    %v573 = vsub.s32 6, %v572
    %v574 = vrot.slane %v545, %v573
    %v575 = vlaneseq
    %v576 = vshrl.u32 %v575, 7
    %v577 = vsub.s32 7, %v576
    %v578 = vrot.slane %v545, %v577
    %v587 = vsub.f32 %v477, %v550
    %v588 = vsub.f32 %v478, %v554
    %v589 = vsub.f32 %v479, %v558
    %v590 = vsub.f32 %v480, %v562
    %v591 = vsub.f32 %v481, %v566
    %v592 = vsub.f32 %v482, %v570
    %v593 = vsub.f32 %v483, %v574
    %v594 = vsub.f32 %v484, %v578
    %v595 = vmul.f32 %v587, 1.442695
    %v596 = vpow.pop %v595
    %v597 = vmul.f32 %v588, 1.442695
    %v598 = vpow.pop %v597
    %v599 = vmul.f32 %v589, 1.442695
    %v600 = vpow.pop %v599
    %v601 = vmul.f32 %v590, 1.442695
    %v602 = vpow.pop %v601
    %v603 = vmul.f32 %v591, 1.442695
    %v604 = vpow.pop %v603
    %v605 = vmul.f32 %v592, 1.442695
    %v606 = vpow.pop %v605
    %v607 = vmul.f32 %v593, 1.442695
    %v608 = vpow.pop %v607
    %v609 = vmul.f32 %v594, 1.442695
    %v610 = vpow.pop %v609
    %619 = vset.pattern.permute.xlu0 0
    %620 = vperm.xlu0 %619, %v596
    %v621 = vpop.permute.xlu0 %620
    %622 = vset.pattern.permute.xlu0 0
    %623 = vperm.xlu0 %622, %v598
    %v624 = vpop.permute.xlu0 %623
    %625 = vset.pattern.permute.xlu0 0
    %626 = vperm.xlu0 %625, %v600
    %v627 = vpop.permute.xlu0 %626
    %628 = vset.pattern.permute.xlu0 0
    %629 = vperm.xlu0 %628, %v602
    %v630 = vpop.permute.xlu0 %629
    %631 = vset.pattern.permute.xlu0 0
    %632 = vperm.xlu0 %631, %v604
    %v633 = vpop.permute.xlu0 %632
    %634 = vset.pattern.permute.xlu0 0
    %635 = vperm.xlu0 %634, %v606
    %v636 = vpop.permute.xlu0 %635
    %637 = vset.pattern.permute.xlu0 0
    %638 = vperm.xlu0 %637, %v608
    %v639 = vpop.permute.xlu0 %638
    %640 = vset.pattern.permute.xlu0 0
    %641 = vperm.xlu0 %640, %v610
    %v642 = vpop.permute.xlu0 %641
    %v643 = vlaneseq
    %v644 = vshrl.u32 %v643, 7
    %v645 = vsub.s32 %v494, %v644
    %v646 = vrot.slane %v621, %v645
    %v647 = vlaneseq
    %v648 = vshrl.u32 %v647, 7
    %v649 = vsub.s32 %v494, %v648
    %v650 = vrot.slane %v624, %v649
    %v651 = vlaneseq
    %v652 = vshrl.u32 %v651, 7
    %v653 = vsub.s32 %v494, %v652
    %v654 = vrot.slane %v627, %v653
    %v655 = vlaneseq
    %v656 = vshrl.u32 %v655, 7
    %v657 = vsub.s32 %v494, %v656
    %v658 = vrot.slane %v630, %v657
    %v659 = vlaneseq
    %v660 = vshrl.u32 %v659, 7
    %v661 = vsub.s32 %v494, %v660
    %v662 = vrot.slane %v633, %v661
    %v663 = vlaneseq
    %v664 = vshrl.u32 %v663, 7
    %v665 = vsub.s32 %v494, %v664
    %v666 = vrot.slane %v636, %v665
    %v667 = vlaneseq
    %v668 = vshrl.u32 %v667, 7
    %v669 = vsub.s32 %v494, %v668
    %v670 = vrot.slane %v639, %v669
    %v671 = vlaneseq
    %v672 = vshrl.u32 %v671, 7
    %v673 = vsub.s32 %v494, %v672
    %v674 = vrot.slane %v642, %v673
    %v675 = vsel %vm527, %v650, %v646
    %v676 = vsel %vm529, %v654, %v675
    %v677 = vsel %vm531, %v658, %v676
    %v678 = vsel %vm533, %v662, %v677
    %v679 = vsel %vm535, %v666, %v678
    %v680 = vsel %vm537, %v670, %v679
    %v681 = vsel %vm539, %v674, %v680
    %v683 = vsel %vm542, %v681, 0.0
    %684 = vadd.xlane.f32.xlu0 %v683
    %v685 = vpop.xlane.xlu0 %684
    %v686 = vrcp.pop %v685
    %v688 = vlaneseq
    %v689 = vshrl.u32 %v688, 7
    %v690 = vsub.s32 0, %v689
    %v691 = vrot.slane %v686, %v690
    %v692 = vlaneseq
    %v693 = vshrl.u32 %v692, 7
    %v694 = vsub.s32 1, %v693
    %v695 = vrot.slane %v686, %v694
    %v696 = vlaneseq
    %v697 = vshrl.u32 %v696, 7
    %v698 = vsub.s32 2, %v697
    %v699 = vrot.slane %v686, %v698
    %v700 = vlaneseq
    %v701 = vshrl.u32 %v700, 7
    %v702 = vsub.s32 3, %v701
    %v703 = vrot.slane %v686, %v702
    %v704 = vlaneseq
    %v705 = vshrl.u32 %v704, 7
    %v706 = vsub.s32 4, %v705
    %v707 = vrot.slane %v686, %v706
    %v708 = vlaneseq
    %v709 = vshrl.u32 %v708, 7
    %v710 = vsub.s32 5, %v709
    %v711 = vrot.slane %v686, %v710
    %v712 = vlaneseq
    %v713 = vshrl.u32 %v712, 7
    %v714 = vsub.s32 6, %v713
    %v715 = vrot.slane %v686, %v714
    %v716 = vlaneseq
    %v717 = vshrl.u32 %v716, 7
    %v718 = vsub.s32 7, %v717
    %v719 = vrot.slane %v686, %v718
    %v728 = vmul.f32 %v596, %v691
    %v729 = vmul.f32 %v598, %v695
    %v730 = vmul.f32 %v600, %v699
    %v731 = vmul.f32 %v602, %v703
    %v732 = vmul.f32 %v604, %v707
    %v733 = vmul.f32 %v606, %v711
    %v734 = vmul.f32 %v608, %v715
    %v735 = vmul.f32 %v610, %v719
    %737 = vset.pattern.permute.xlu0 0
    %738 = vperm.xlu0 %737, %v728
    %v739 = vpop.permute.xlu0 %738
    %742 = vset.pattern.permute.xlu0 0
    %743 = vperm.xlu0 %742, %v729
    %v744 = vpop.permute.xlu0 %743
    %747 = vset.pattern.permute.xlu0 0
    %748 = vperm.xlu0 %747, %v730
    %v749 = vpop.permute.xlu0 %748
    %752 = vset.pattern.permute.xlu0 0
    %753 = vperm.xlu0 %752, %v731
    %v754 = vpop.permute.xlu0 %753
    %757 = vset.pattern.permute.xlu0 0
    %758 = vperm.xlu0 %757, %v732
    %v759 = vpop.permute.xlu0 %758
    %762 = vset.pattern.permute.xlu0 0
    %763 = vperm.xlu0 %762, %v733
    %v764 = vpop.permute.xlu0 %763
    %767 = vset.pattern.permute.xlu0 0
    %768 = vperm.xlu0 %767, %v734
    %v769 = vpop.permute.xlu0 %768
    %772 = vset.pattern.permute.xlu0 0
    %773 = vperm.xlu0 %772, %v735
    %v774 = vpop.permute.xlu0 %773
    %v776 = vmul.f32 %v739, %v89
    %v777 = vmul.f32 %v744, %v90
    %v778 = vmul.f32 %v749, %v91
    %v779 = vmul.f32 %v754, %v92
    %v780 = vmul.f32 %v759, %v93
    %v781 = vmul.f32 %v764, %v94
    %v782 = vmul.f32 %v769, %v95
    %v783 = vmul.f32 %v774, %v96
    %v784 = vsel %vm108, %v776, 0.0
    %v785 = vrot.slane %v784, 4
    %v786 = vadd.f32 %v784, %v785
    %v787 = vrot.slane %v786, 2
    %v788 = vadd.f32 %v786, %v787
    %v789 = vrot.slane %v788, 1
    %v790 = vadd.f32 %v788, %v789
    %v791 = vsel %vm108, %v777, 0.0
    %v792 = vrot.slane %v791, 4
    %v793 = vadd.f32 %v791, %v792
    %v794 = vrot.slane %v793, 2
    %v795 = vadd.f32 %v793, %v794
    %v796 = vrot.slane %v795, 1
    %v797 = vadd.f32 %v795, %v796
    %v798 = vsel %vm108, %v778, 0.0
    %v799 = vrot.slane %v798, 4
    %v800 = vadd.f32 %v798, %v799
    %v801 = vrot.slane %v800, 2
    %v802 = vadd.f32 %v800, %v801
    %v803 = vrot.slane %v802, 1
    %v804 = vadd.f32 %v802, %v803
    %v805 = vsel %vm108, %v779, 0.0
    %v806 = vrot.slane %v805, 4
    %v807 = vadd.f32 %v805, %v806
    %v808 = vrot.slane %v807, 2
    %v809 = vadd.f32 %v807, %v808
    %v810 = vrot.slane %v809, 1
    %v811 = vadd.f32 %v809, %v810
    %v812 = vsel %vm108, %v780, 0.0
    %v813 = vrot.slane %v812, 4
    %v814 = vadd.f32 %v812, %v813
    %v815 = vrot.slane %v814, 2
    %v816 = vadd.f32 %v814, %v815
    %v817 = vrot.slane %v816, 1
    %v818 = vadd.f32 %v816, %v817
    %v819 = vsel %vm108, %v781, 0.0
    %v820 = vrot.slane %v819, 4
    %v821 = vadd.f32 %v819, %v820
    %v822 = vrot.slane %v821, 2
    %v823 = vadd.f32 %v821, %v822
    %v824 = vrot.slane %v823, 1
    %v825 = vadd.f32 %v823, %v824
    %v826 = vsel %vm108, %v782, 0.0
    %v827 = vrot.slane %v826, 4
    %v828 = vadd.f32 %v826, %v827
    %v829 = vrot.slane %v828, 2
    %v830 = vadd.f32 %v828, %v829
    %v831 = vrot.slane %v830, 1
    %v832 = vadd.f32 %v830, %v831
    %v833 = vsel %vm108, %v783, 0.0
    %v834 = vrot.slane %v833, 4
    %v835 = vadd.f32 %v833, %v834
    %v836 = vrot.slane %v835, 2
    %v837 = vadd.f32 %v835, %v836
    %v838 = vrot.slane %v837, 1
    %v839 = vadd.f32 %v837, %v838
    %v848 = vsel %vm527, %v797, %v790
    %v849 = vsel %vm529, %v804, %v848
    %v850 = vsel %vm531, %v811, %v849
    %v851 = vsel %vm533, %v818, %v850
    %v852 = vsel %vm535, %v825, %v851
    %v853 = vsel %vm537, %v832, %v852
    %v854 = vsel %vm539, %v839, %v853
    %856 = vst.msk [vmem:[#allocation11] sm:$0xff] %vm108, %v854
    %v857 = vlaneseq
    %v858 = vshrl.u32 %v857, 7
    %v859 = vsub.s32 %v494, %v858
    %v860 = vrot.slane %v739, %v859
    %v861 = vlaneseq
    %v862 = vshrl.u32 %v861, 7
    %v863 = vsub.s32 %v494, %v862
    %v864 = vrot.slane %v744, %v863
    %v865 = vlaneseq
    %v866 = vshrl.u32 %v865, 7
    %v867 = vsub.s32 %v494, %v866
    %v868 = vrot.slane %v749, %v867
    %v869 = vlaneseq
    %v870 = vshrl.u32 %v869, 7
    %v871 = vsub.s32 %v494, %v870
    %v872 = vrot.slane %v754, %v871
    %v873 = vlaneseq
    %v874 = vshrl.u32 %v873, 7
    %v875 = vsub.s32 %v494, %v874
    %v876 = vrot.slane %v759, %v875
    %v877 = vlaneseq
    %v878 = vshrl.u32 %v877, 7
    %v879 = vsub.s32 %v494, %v878
    %v880 = vrot.slane %v764, %v879
    %v881 = vlaneseq
    %v882 = vshrl.u32 %v881, 7
    %v883 = vsub.s32 %v494, %v882
    %v884 = vrot.slane %v769, %v883
    %v885 = vlaneseq
    %v886 = vshrl.u32 %v885, 7
    %v887 = vsub.s32 %v494, %v886
    %v888 = vrot.slane %v774, %v887
    %v889 = vsel %vm527, %v864, %v860
    %v890 = vsel %vm529, %v868, %v889
    %v891 = vsel %vm531, %v872, %v890
    %v892 = vsel %vm533, %v876, %v891
    %v893 = vsel %vm535, %v880, %v892
    %v894 = vsel %vm537, %v884, %v893
    %v895 = vsel %vm539, %v888, %v894
    %897 = vst.msk [vmem:[#allocation12] sm:$0xff] %vm542, %v895
    // Predicated region
    $region50: #{tpu_custom_call.1} parent=1 // pred_check
      _
    $region51: #{tpu_custom_call.1} parent=1 // pred_check_branch
      %899 = sbr.rel (0) target = $region53
    $region52: #{tpu_custom_call.1} parent=1 // pred_region
      %s901 = ssub.s32 128, 128
      %902 = vsyncadd [#allocation5], %s901
      %s904 = sshll.u32 [#allocation11], 4
      %s905 = int_to_ptr.vmem [resolvable:$true] %s904
      %907 = dma.vmem_to_hbm [thread:$0]  %s905, 128, %s8, [#allocation5]
    $region53: #{tpu_custom_call.1} parent=1 // pred_fallthru
      _
    // Predicated region
    $region54: #{tpu_custom_call.1} parent=1 // pred_check
      _
    $region55: #{tpu_custom_call.1} parent=1 // pred_check_branch
      %909 = sbr.rel (0) target = $region57
    $region56: #{tpu_custom_call.1} parent=1 // pred_region
      %s911 = ssub.s32 128, 128
      %912 = vsyncadd [#allocation13], %s911
      %s914 = sshll.u32 [#allocation12], 4
      %s915 = int_to_ptr.vmem [resolvable:$true] %s914
      %917 = dma.vmem_to_hbm [thread:$0]  %s915, 128, %s9, [#allocation13]
    $region57: #{tpu_custom_call.1} parent=1 // pred_fallthru
      _
    // Predicated region
    $region58: #{tpu_custom_call.1} parent=1 // pred_check
      _
    $region59: #{tpu_custom_call.1} parent=1 // pred_check_branch
      %919 = sbr.rel (0) target = $region61
    $region60: #{tpu_custom_call.1} parent=1 // pred_region
      %920 = dma.done [#allocation5], 128
    $region61: #{tpu_custom_call.1} parent=1 // pred_fallthru
      _
    // Predicated region
    $region62: #{tpu_custom_call.1} parent=1 // pred_check
      _
    $region63: #{tpu_custom_call.1} parent=1 // pred_check_branch
      %922 = sbr.rel (0) target = $region65
    $region64: #{tpu_custom_call.1} parent=1 // pred_region
      %923 = dma.done [#allocation13], 128
    $region65: #{tpu_custom_call.1} parent=1 // pred_fallthru
      _
    %924 = vsyncpa [#allocation4], 1
    %925 = vsyncpa [#allocation7], 1
    %926 = vsyncpa [#allocation10], 1
    %927 = vsyncpa [#allocation5], 1
    %928 = vsyncpa [#allocation13], 1

</llo_original>
